<compile_context>
chip_gen: v7x
topology: tpu7x:2x2x1
jax: 0.10.0
libtpu: 0.0.40
codegen_flags: <defaults>
</compile_context>

<pallas_src>
import jax
import jax.numpy as jnp
from jax.experimental import pallas as pl
from jax.experimental.pallas import tpu as pltpu


def _relu_kernel(x_ref, o_ref):
    # Single vmax per vreg on the VPU; scalar 0 avoids materializing a zero tile.
    o_ref[...] = jnp.maximum(x_ref[...], 0)


def asact_forward(x, *, target_block_rows=2048):
    """Forward pass of ASAct (use_ann=True) -> ReLU(x). x is NCHW (any shape works)."""
    orig_shape = x.shape
    dtype = x.dtype
    n_elem = x.size

    lane = 128
    itemsize = jnp.dtype(dtype).itemsize
    # Sublane pack factor: 8 for 32-bit, 16 for 16-bit, 32 for 8-bit dtypes.
    sub = max(8, 32 // itemsize)

    rows = pl.cdiv(n_elem, lane)
    rows_aligned = pl.cdiv(rows, sub) * sub

    # Largest block that is a multiple of the sublane pack and <= target.
    block_rows = min(target_block_rows, rows_aligned)
    block_rows = max(sub, (block_rows // sub) * sub)
    rows_padded = pl.cdiv(rows_aligned, block_rows) * block_rows
    total = rows_padded * lane

    x_flat = x.reshape(-1)
    if total != n_elem:
        # Single pad op, only in the ragged case; zero-padding is ReLU-invariant.
        x_flat = jnp.pad(x_flat, (0, total - n_elem))
    x2d = x_flat.reshape(rows_padded, lane)

    grid = rows_padded // block_rows

    out2d = pl.pallas_call(
        _relu_kernel,
        out_shape=jax.ShapeDtypeStruct((rows_padded, lane), dtype),
        grid=(grid,),
        in_specs=[pl.BlockSpec((block_rows, lane), lambda i: (i, 0))],
        out_specs=pl.BlockSpec((block_rows, lane), lambda i: (i, 0)),
        compiler_params=pltpu.CompilerParams(
            dimension_semantics=("parallel",),
        ),
    )(x2d)

    out = out2d.reshape(-1)
    if total != n_elem:
        out = out[:n_elem]
    return out.reshape(orig_shape)

# TODO(synk): the use_ann=False (LIFSpike) branch carries stateful membrane
# potential across calls; ASAct's forward with default __init__ never takes
# that branch, so only the ReLU path is implemented here.


if __name__ == "__main__":
    key = jax.random.PRNGKey(0)
    # Small NCHW input consistent with a conv-activation module.
    x = jax.random.normal(key, (2, 4, 16, 16), dtype=jnp.float32)

    y = asact_forward(x)
    jax.block_until_ready(y)

    # Sanity check against plain JAX ReLU.
    ref = jnp.maximum(x, 0.0)
    assert y.shape == x.shape and y.dtype == x.dtype
    assert bool(jnp.allclose(y, ref)), "mismatch vs reference ReLU"
    print("KERNEL_OK")
</pallas_src>

<mosaic_0001>
module attributes {stable_mosaic.version = 11 : i64} {
  func.func @_relu_kernel(%arg0: i32, %arg1: memref<16x128xf32, #tpu.memory_space<vmem>>, %arg2: memref<16x128xf32, #tpu.memory_space<vmem>>) attributes {dimension_semantics = [#tpu.dimension_semantics<parallel>], iteration_bounds = array<i64: 1>, scalar_prefetch = 0 : i64, scratch_operands = 0 : i64, tpu.core_type = #tpu.core_type<tc>, window_params = [{transform_indices = @transform_0, window_bounds = array<i64: 16, 128>}, {transform_indices = @transform_1, window_bounds = array<i64: 16, 128>}]} {
    %c0 = arith.constant 0 : index
    %c0_0 = arith.constant 0 : index
    %0 = vector.load %arg1[%c0, %c0_0] : memref<16x128xf32, #tpu.memory_space<vmem>>, vector<16x128xf32>
    %cst = arith.constant 0.000000e+00 : f32
    %1 = vector.broadcast %cst : f32 to vector<16x128xf32>
    %2 = arith.maximumf %0, %1 : vector<16x128xf32>
    %c0_1 = arith.constant 0 : index
    %c0_2 = arith.constant 0 : index
    %3 = vector.load %arg2[%c0_1, %c0_2] : memref<16x128xf32, #tpu.memory_space<vmem>>, vector<16x128xf32>
    tpu.vector_store %arg2[%c0_1, %c0_2], %2 {strides = array<i32>} : memref<16x128xf32, #tpu.memory_space<vmem>>, vector<16x128xf32>,
    return
  }
  func.func @transform_0(%arg0: i32) -> (i32, i32) {
    %c0_i32 = arith.constant 0 : i32
    %c0_i32_0 = arith.constant 0 : i32
    return %arg0, %c0_i32 : i32, i32
  }
  func.func @transform_1(%arg0: i32) -> (i32, i32) {
    %c0_i32 = arith.constant 0 : i32
    %c0_i32_0 = arith.constant 0 : i32
    return %arg0, %c0_i32 : i32, i32
  }
}

</mosaic_0001>

<llo_original>
// kernel: tpu_custom_call.1
$region0: #{tpu_custom_call.1}
  #allocation0 [shape = 'u32[]', space=smem, size = 0x4, offset = 0x4, fixed_abs, tag = 'smem constant byte address 0x4 - core index']
  #allocation1 [shape = 'u32[144,128]{1,0:T(1,128)}', space=vmem, size = 0x12000, scoped, tag = 'internal scratch']
  %s0 = inlined_call_operand.hbm [shape: f32[16,128], index: 0, kind: input, shape index: {}]
  %s1 = inlined_call_operand.hbm [shape: f32[16,128], index: 1, kind: output, shape index: {}]
  %s2 = sld [smem:[#allocation0]]
  $region18: #{tpu_custom_call.1} parent=0
    _
  %s4 = ssub.s32 1, %s2
  %s5 = scalar_select 0, %s4, %s2
  $region1: #{tpu_custom_call.1} parent=0
    #allocation2 [shape = 'u8[8192]{0}', space=vmem, size = 0x2000, scoped, tag = 'input window, operand 0, single buffered']
    #allocation3 [shape = 's32[1]{0}', space=sflag, size = 0x4, scoped, tag = 'scoped memory for tpu_custom_call.1']
    #allocation4 [shape = 's32[1]{0}', space=sflag, size = 0x4, scoped, tag = 'scoped memory for tpu_custom_call.1']
    #allocation5 [shape = 'u8[8192]{0}', space=vmem, size = 0x2000, scoped, tag = 'output window, operand 0, single buffered']
    %6 = vsyncpa [#allocation3], 0
    %7 = vsyncpa [#allocation4], 0
    // Predicated region
    $region2: #{tpu_custom_call.1} parent=1 // pred_check
      _
    $region3: #{tpu_custom_call.1} parent=1 // pred_check_branch
      %9 = sbr.rel (0) target = $region5
    $region4: #{tpu_custom_call.1} parent=1 // pred_region
      %s11 = ssub.s32 256, 256
      %12 = vsyncadd [#allocation3], %s11
      %s13 = sshll.u32 [#allocation2], 4
      %s14 = int_to_ptr.vmem [resolvable:$true] %s13
      %19 = dma.hbm_to_vmem [thread:$0]  %s0, 256, %s14, [#allocation3], 128, 128, 8
    $region5: #{tpu_custom_call.1} parent=1 // pred_fallthru
      _
    // Predicated region
    $region6: #{tpu_custom_call.1} parent=1 // pred_check
      _
    $region7: #{tpu_custom_call.1} parent=1 // pred_check_branch
      %21 = sbr.rel (0) target = $region9
    $region8: #{tpu_custom_call.1} parent=1 // pred_region
      %22 = dma.done [#allocation3], 256
    $region9: #{tpu_custom_call.1} parent=1 // pred_fallthru
      _
    %v23 = vld [vmem:[#allocation2] sm:$0xff]
    %v24 = vld [vmem:[#allocation2 + $0x8] sm:$0xff]
    %v25 = vmax.f32 %v23, 0.0
    %v26 = vmax.f32 %v24, 0.0
    %27 = vst [vmem:[#allocation5] sm:$0xff] %v25
    %28 = vst [vmem:[#allocation5 + $0x8] sm:$0xff] %v26
    // Predicated region
    $region10: #{tpu_custom_call.1} parent=1 // pred_check
      _
    $region11: #{tpu_custom_call.1} parent=1 // pred_check_branch
      %30 = sbr.rel (0) target = $region13
    $region12: #{tpu_custom_call.1} parent=1 // pred_region
      %s32 = ssub.s32 256, 256
      %33 = vsyncadd [#allocation4], %s32
      %s34 = sshll.u32 [#allocation5], 4
      %s35 = int_to_ptr.vmem [resolvable:$true] %s34
      %40 = dma.vmem_to_hbm [thread:$0]  %s35, 256, %s1, [#allocation4], 128, 128, 8
    $region13: #{tpu_custom_call.1} parent=1 // pred_fallthru
      _
    // Predicated region
    $region14: #{tpu_custom_call.1} parent=1 // pred_check
      _
    $region15: #{tpu_custom_call.1} parent=1 // pred_check_branch
      %42 = sbr.rel (0) target = $region17
    $region16: #{tpu_custom_call.1} parent=1 // pred_region
      %43 = dma.done [#allocation4], 256
    $region17: #{tpu_custom_call.1} parent=1 // pred_fallthru
      _
    %44 = vsyncpa [#allocation3], 1
    %45 = vsyncpa [#allocation4], 1

</llo_original>
